<compile_context>
chip_gen: v7x
topology: tpu7x:2x2x1
jax: 0.10.0
libtpu: 0.0.40
codegen_flags: <defaults>
</compile_context>

<pallas_src>
import jax
import jax.numpy as jnp
from jax.experimental import pallas as pl
from jax.experimental.pallas import tpu as pltpu


def _round_up(n, m):
    return ((n + m - 1) // m) * m


def mlp_kernel(x_ref, mask_ref, w1_ref, b1_ref, w2_ref, b2_ref, w3_ref, b3_ref,
               o_ref):
    """One batch tile of: 3x (Linear [+ReLU]) -> dropout mask -> softmax(dim=1)."""
    cd = w1_ref.dtype  # matmul-operand dtype (f32 by default, optionally bf16)

    x = x_ref[...]
    h1 = jnp.dot(x, w1_ref[...], preferred_element_type=jnp.float32) + b1_ref[...]
    h1 = jnp.maximum(h1, 0.0)

    h2 = jnp.dot(h1.astype(cd), w2_ref[...],
                 preferred_element_type=jnp.float32) + b2_ref[...]
    h2 = jnp.maximum(h2, 0.0)

    logits = jnp.dot(h2.astype(cd), w3_ref[...],
                     preferred_element_type=jnp.float32) + b3_ref[...]

    # Inverted dropout (PyTorch train-mode semantics): mask entries are either
    # 0 or 1/(1-p), precomputed in the wrapper.
    logits = logits * mask_ref[...]

    # Softmax over the feature axis (dim=1).  One reciprocal per row on the
    # (TB, 1) column, then a cheap broadcast multiply.
    m = jnp.max(logits, axis=1, keepdims=True)
    e = jnp.exp(logits - m)
    inv = 1.0 / jnp.sum(e, axis=1, keepdims=True)
    o_ref[...] = (e * inv).astype(o_ref.dtype)


def my_module_forward(x, params, *, drop_prob=0.3, training=True,
                      dropout_key=None, block_rows=512,
                      compute_dtype=jnp.float32):
    """Pallas equivalent of MyModule.forward.

    params = (w1, b1, w2, b2, w3, b3); weights stored [in, out], biases [1, out].
    `compute_dtype=jnp.bfloat16` optionally halves matmul-operand bytes
    (accumulation stays f32 via preferred_element_type); epilogue math is f32.
    """
    w1, b1, w2, b2, w3, b3 = params
    B, num_in = x.shape
    num_out = w3.shape[1]

    # ---- batch tiling (pipelined grid) ------------------------------------
    TB = min(block_rows, _round_up(B, 8))      # rows per tile, multiple of 8
    B_pad = _round_up(B, TB)                   # pad so the grid divides evenly
    if B_pad != B:
        x = jnp.pad(x, ((0, B_pad - B), (0, 0)))
    grid = (B_pad // TB,)

    # ---- dropout keep/scale mask (generated outside the kernel) -----------
    if training and drop_prob > 0.0:
        if dropout_key is None:
            dropout_key = jax.random.PRNGKey(0)
        keep = jax.random.bernoulli(dropout_key, 1.0 - drop_prob, (B_pad, num_out))
        mask = keep.astype(jnp.float32) * jnp.float32(1.0 / (1.0 - drop_prob))
    else:
        mask = jnp.ones((B_pad, num_out), jnp.float32)

    # ---- optional bf16 matmul operands -------------------------------------
    x = x.astype(compute_dtype)
    w1c = w1.astype(compute_dtype)
    w2c = w2.astype(compute_dtype)
    w3c = w3.astype(compute_dtype)

    def resident(shape):
        # Constant block index: DMA'd once, stays resident in VMEM across the
        # whole batch grid (weights/biases are only a few KB).
        return pl.BlockSpec(shape, lambda i: (0,) * len(shape))

    grid_spec = pltpu.PrefetchScalarGridSpec(
        num_scalar_prefetch=0,
        grid=grid,
        in_specs=[
            pl.BlockSpec((TB, num_in), lambda i: (i, 0)),    # x: tiled over batch
            pl.BlockSpec((TB, num_out), lambda i: (i, 0)),   # dropout mask
            resident(w1c.shape), resident(b1.shape),
            resident(w2c.shape), resident(b2.shape),
            resident(w3c.shape), resident(b3.shape),
        ],
        out_specs=pl.BlockSpec((TB, num_out), lambda i: (i, 0)),
    )

    out = pl.pallas_call(
        mlp_kernel,
        out_shape=jax.ShapeDtypeStruct((B_pad, num_out), jnp.float32),
        grid_spec=grid_spec,
        compiler_params=pltpu.CompilerParams(
            # Batch tiles are independent -> shard across v7x's 2 TensorCores;
            # harmless no-op on single-TC v5e/v6e.
            dimension_semantics=("parallel",)),
    )(x, mask, w1c, b1, w2c, b2, w3c, b3)

    return out[:B] if B_pad != B else out


def init_params(key, num_in, num_out):
    """Deterministic init mimicking PyTorch nn.Linear U(-1/sqrt(fan_in), 1/sqrt(fan_in))."""
    dims = [(num_in, 5), (5, 20), (20, num_out)]
    params = []
    for (fan_in, fan_out) in dims:
        key, kw, kb = jax.random.split(key, 3)
        bound = 1.0 / (fan_in ** 0.5)
        w = jax.random.uniform(kw, (fan_in, fan_out), jnp.float32, -bound, bound)
        b = jax.random.uniform(kb, (1, fan_out), jnp.float32, -bound, bound)
        params += [w, b]
    return tuple(params)


if __name__ == "__main__":
    key = jax.random.PRNGKey(0)
    batch, num_in, num_out = 8, 32, 16

    kx, kp, kd = jax.random.split(key, 3)
    x = jax.random.normal(kx, (batch, num_in), jnp.float32)
    params = init_params(kp, num_in, num_out)

    # Default nn.Module is in training mode -> dropout active (deterministic key).
    out = my_module_forward(x, params, drop_prob=0.3, training=True,
                            dropout_key=kd)
    out = jax.block_until_ready(out)

    assert out.shape == (batch, num_out)
    # Softmax rows must sum to 1.
    assert jnp.allclose(jnp.sum(out, axis=1), 1.0, atol=1e-5)
    assert jnp.all(out >= 0.0)

    # Eval-mode path (no dropout) also runs.
    out_eval = jax.block_until_ready(
        my_module_forward(x, params, drop_prob=0.3, training=False))
    assert jnp.allclose(jnp.sum(out_eval, axis=1), 1.0, atol=1e-5)

    print("KERNEL_OK")
</pallas_src>

<mosaic_0001>
module attributes {stable_mosaic.version = 11 : i64} {
  func.func @mlp_kernel(%arg0: i32, %arg1: memref<8x32xf32, #tpu.memory_space<vmem>>, %arg2: memref<8x16xf32, #tpu.memory_space<vmem>>, %arg3: memref<32x5xf32, #tpu.memory_space<vmem>>, %arg4: memref<1x5xf32, #tpu.memory_space<vmem>>, %arg5: memref<5x20xf32, #tpu.memory_space<vmem>>, %arg6: memref<1x20xf32, #tpu.memory_space<vmem>>, %arg7: memref<20x16xf32, #tpu.memory_space<vmem>>, %arg8: memref<1x16xf32, #tpu.memory_space<vmem>>, %arg9: memref<8x16xf32, #tpu.memory_space<vmem>>) attributes {dimension_semantics = [#tpu.dimension_semantics<parallel>], iteration_bounds = array<i64: 1>, scalar_prefetch = 0 : i64, scratch_operands = 0 : i64, tpu.core_type = #tpu.core_type<tc>, window_params = [{transform_indices = @transform_0, window_bounds = array<i64: 8, 32>}, {transform_indices = @transform_1, window_bounds = array<i64: 8, 16>}, {pipeline_mode = #tpu.pipeline_mode<synchronous>, transform_indices = @transform_2, window_bounds = array<i64: 32, 5>}, {pipeline_mode = #tpu.pipeline_mode<synchronous>, transform_indices = @transform_3, window_bounds = array<i64: 1, 5>}, {pipeline_mode = #tpu.pipeline_mode<synchronous>, transform_indices = @transform_4, window_bounds = array<i64: 5, 20>}, {pipeline_mode = #tpu.pipeline_mode<synchronous>, transform_indices = @transform_5, window_bounds = array<i64: 1, 20>}, {pipeline_mode = #tpu.pipeline_mode<synchronous>, transform_indices = @transform_6, window_bounds = array<i64: 20, 16>}, {pipeline_mode = #tpu.pipeline_mode<synchronous>, transform_indices = @transform_7, window_bounds = array<i64: 1, 16>}, {transform_indices = @transform_8, window_bounds = array<i64: 8, 16>}]} {
    %c0 = arith.constant 0 : index
    %c0_0 = arith.constant 0 : index
    %0 = vector.load %arg1[%c0, %c0_0] : memref<8x32xf32, #tpu.memory_space<vmem>>, vector<8x32xf32>
    %c0_1 = arith.constant 0 : index
    %c0_2 = arith.constant 0 : index
    %1 = vector.load %arg3[%c0_1, %c0_2] : memref<32x5xf32, #tpu.memory_space<vmem>>, vector<32x5xf32>
    %cst = arith.constant dense<0.000000e+00> : vector<8x5xf32>
    %2 = tpu.matmul %0, %1, %cst {dimension_numbers = #tpu.dot_dimension_numbers<[1], [0], [0], [1], [0, 0, 1, 1], [], []>} : vector<8x32xf32>, vector<32x5xf32>, vector<8x5xf32> -> vector<8x5xf32>
    %c0_3 = arith.constant 0 : index
    %c0_4 = arith.constant 0 : index
    %3 = vector.load %arg4[%c0_3, %c0_4] : memref<1x5xf32, #tpu.memory_space<vmem>>, vector<1x5xf32>
    %4 = vector.broadcast %3 : vector<1x5xf32> to vector<8x5xf32>
    %5 = arith.addf %2, %4 : vector<8x5xf32>
    %cst_5 = arith.constant 0.000000e+00 : f32
    %6 = vector.broadcast %cst_5 : f32 to vector<8x5xf32>
    %7 = arith.maximumf %5, %6 : vector<8x5xf32>
    %c0_6 = arith.constant 0 : index
    %c0_7 = arith.constant 0 : index
    %8 = vector.load %arg5[%c0_6, %c0_7] : memref<5x20xf32, #tpu.memory_space<vmem>>, vector<5x20xf32>
    %cst_8 = arith.constant dense<0.000000e+00> : vector<8x20xf32>
    %9 = tpu.matmul %7, %8, %cst_8 {dimension_numbers = #tpu.dot_dimension_numbers<[1], [0], [0], [1], [0, 0, 1, 1], [], []>} : vector<8x5xf32>, vector<5x20xf32>, vector<8x20xf32> -> vector<8x20xf32>
    %c0_9 = arith.constant 0 : index
    %c0_10 = arith.constant 0 : index
    %10 = vector.load %arg6[%c0_9, %c0_10] : memref<1x20xf32, #tpu.memory_space<vmem>>, vector<1x20xf32>
    %11 = vector.broadcast %10 : vector<1x20xf32> to vector<8x20xf32>
    %12 = arith.addf %9, %11 : vector<8x20xf32>
    %cst_11 = arith.constant 0.000000e+00 : f32
    %13 = vector.broadcast %cst_11 : f32 to vector<8x20xf32>
    %14 = arith.maximumf %12, %13 : vector<8x20xf32>
    %c0_12 = arith.constant 0 : index
    %c0_13 = arith.constant 0 : index
    %15 = vector.load %arg7[%c0_12, %c0_13] : memref<20x16xf32, #tpu.memory_space<vmem>>, vector<20x16xf32>
    %cst_14 = arith.constant dense<0.000000e+00> : vector<8x16xf32>
    %16 = tpu.matmul %14, %15, %cst_14 {dimension_numbers = #tpu.dot_dimension_numbers<[1], [0], [0], [1], [0, 0, 1, 1], [], []>} : vector<8x20xf32>, vector<20x16xf32>, vector<8x16xf32> -> vector<8x16xf32>
    %c0_15 = arith.constant 0 : index
    %c0_16 = arith.constant 0 : index
    %17 = vector.load %arg8[%c0_15, %c0_16] : memref<1x16xf32, #tpu.memory_space<vmem>>, vector<1x16xf32>
    %18 = vector.broadcast %17 : vector<1x16xf32> to vector<8x16xf32>
    %19 = arith.addf %16, %18 : vector<8x16xf32>
    %c0_17 = arith.constant 0 : index
    %c0_18 = arith.constant 0 : index
    %20 = vector.load %arg2[%c0_17, %c0_18] : memref<8x16xf32, #tpu.memory_space<vmem>>, vector<8x16xf32>
    %21 = arith.mulf %19, %20 : vector<8x16xf32>
    %cst_19 = arith.constant dense<0xFF800000> : vector<8xf32>
    %22 = vector.multi_reduction <maximumf>, %21, %cst_19 [1] : vector<8x16xf32> to vector<8xf32>
    %23 = vector.shape_cast %22 : vector<8xf32> to vector<8x1xf32>
    %24 = vector.broadcast %23 : vector<8x1xf32> to vector<8x16xf32>
    %25 = arith.subf %21, %24 : vector<8x16xf32>
    %26 = math.exp %25 : vector<8x16xf32>
    %cst_20 = arith.constant dense<0.000000e+00> : vector<8xf32>
    %27 = vector.multi_reduction <add>, %26, %cst_20 [1] : vector<8x16xf32> to vector<8xf32>
    %28 = vector.shape_cast %27 : vector<8xf32> to vector<8x1xf32>
    %cst_21 = arith.constant 1.000000e+00 : f32
    %29 = vector.broadcast %cst_21 : f32 to vector<8x1xf32>
    %30 = arith.divf %29, %28 : vector<8x1xf32>
    %31 = vector.broadcast %30 : vector<8x1xf32> to vector<8x16xf32>
    %32 = arith.mulf %26, %31 : vector<8x16xf32>
    %c0_22 = arith.constant 0 : index
    %c0_23 = arith.constant 0 : index
    %33 = vector.load %arg9[%c0_22, %c0_23] : memref<8x16xf32, #tpu.memory_space<vmem>>, vector<8x16xf32>
    tpu.vector_store %arg9[%c0_22, %c0_23], %32 {strides = array<i32>} : memref<8x16xf32, #tpu.memory_space<vmem>>, vector<8x16xf32>,
    return
  }
  func.func @transform_0(%arg0: i32) -> (i32, i32) {
    %c0_i32 = arith.constant 0 : i32
    %c0_i32_0 = arith.constant 0 : i32
    return %arg0, %c0_i32 : i32, i32
  }
  func.func @transform_1(%arg0: i32) -> (i32, i32) {
    %c0_i32 = arith.constant 0 : i32
    %c0_i32_0 = arith.constant 0 : i32
    return %arg0, %c0_i32 : i32, i32
  }
  func.func @transform_2(%arg0: i32) -> (i32, i32) {
    %c0_i32 = arith.constant 0 : i32
    %c0_i32_0 = arith.constant 0 : i32
    %c0_i32_1 = arith.constant 0 : i32
    return %c0_i32, %c0_i32_0 : i32, i32
  }
  func.func @transform_3(%arg0: i32) -> (i32, i32) {
    %c0_i32 = arith.constant 0 : i32
    %c0_i32_0 = arith.constant 0 : i32
    %c0_i32_1 = arith.constant 0 : i32
    return %c0_i32, %c0_i32_0 : i32, i32
  }
  func.func @transform_4(%arg0: i32) -> (i32, i32) {
    %c0_i32 = arith.constant 0 : i32
    %c0_i32_0 = arith.constant 0 : i32
    %c0_i32_1 = arith.constant 0 : i32
    return %c0_i32, %c0_i32_0 : i32, i32
  }
  func.func @transform_5(%arg0: i32) -> (i32, i32) {
    %c0_i32 = arith.constant 0 : i32
    %c0_i32_0 = arith.constant 0 : i32
    %c0_i32_1 = arith.constant 0 : i32
    return %c0_i32, %c0_i32_0 : i32, i32
  }
  func.func @transform_6(%arg0: i32) -> (i32, i32) {
    %c0_i32 = arith.constant 0 : i32
    %c0_i32_0 = arith.constant 0 : i32
    %c0_i32_1 = arith.constant 0 : i32
    return %c0_i32, %c0_i32_0 : i32, i32
  }
  func.func @transform_7(%arg0: i32) -> (i32, i32) {
    %c0_i32 = arith.constant 0 : i32
    %c0_i32_0 = arith.constant 0 : i32
    %c0_i32_1 = arith.constant 0 : i32
    return %c0_i32, %c0_i32_0 : i32, i32
  }
  func.func @transform_8(%arg0: i32) -> (i32, i32) {
    %c0_i32 = arith.constant 0 : i32
    %c0_i32_0 = arith.constant 0 : i32
    return %arg0, %c0_i32 : i32, i32
  }
}

</mosaic_0001>

<llo_original>
// kernel: tpu_custom_call.1
$region0: #{tpu_custom_call.1}
  #allocation0 [shape = 'u32[]', space=smem, size = 0x4, offset = 0x4, fixed_abs, tag = 'smem constant byte address 0x4 - core index']
  #allocation1 [shape = 'u32[144,128]{1,0:T(1,128)}', space=vmem, size = 0x12000, scoped, tag = 'internal scratch']
  %s0 = inlined_call_operand.vmem [shape: f32[8,32], index: 0, kind: input, shape index: {}]
  %s1 = inlined_call_operand.vmem [shape: f32[8,16], index: 1, kind: input, shape index: {}]
  %s2 = inlined_call_operand.vmem [shape: f32[32,5], index: 2, kind: input, shape index: {}]
  %s3 = inlined_call_operand.vmem [shape: f32[1,5], index: 3, kind: input, shape index: {}]
  %s4 = inlined_call_operand.vmem [shape: f32[5,20], index: 4, kind: input, shape index: {}]
  %s5 = inlined_call_operand.vmem [shape: f32[1,20], index: 5, kind: input, shape index: {}]
  %s6 = inlined_call_operand.vmem [shape: f32[20,16], index: 6, kind: input, shape index: {}]
  %s7 = inlined_call_operand.vmem [shape: f32[1,16], index: 7, kind: input, shape index: {}]
  %s8 = inlined_call_operand.hbm [shape: f32[8,16], index: 8, kind: output, shape index: {}]
  %s9 = sld [smem:[#allocation0]]
  $region42: #{tpu_custom_call.1} parent=0
    _
  %s11 = ssub.s32 1, %s9
  %s12 = scalar_select 0, %s11, %s9
  $region1: #{tpu_custom_call.1} parent=0
    #allocation2 [shape = 'u8[4096]{0}', space=vmem, size = 0x1000, scoped, tag = 'output window, operand 0, single buffered']
    #allocation3 [shape = 's32[1]{0}', space=sflag, size = 0x4, scoped, tag = 'scoped memory for tpu_custom_call.1']
    %13 = vsyncpa [#allocation3], 0
    // Predicated region
    $region2: #{tpu_custom_call.1} parent=1 // pred_check
      _
    $region3: #{tpu_custom_call.1} parent=1 // pred_check_branch
      %15 = sbr.rel (0) target = $region5
    $region4: #{tpu_custom_call.1} parent=1 // pred_region
      _
    $region5: #{tpu_custom_call.1} parent=1 // pred_fallthru
      _
    // Predicated region
    $region6: #{tpu_custom_call.1} parent=1 // pred_check
      _
    $region7: #{tpu_custom_call.1} parent=1 // pred_check_branch
      %17 = sbr.rel (0) target = $region9
    $region8: #{tpu_custom_call.1} parent=1 // pred_region
      _
    $region9: #{tpu_custom_call.1} parent=1 // pred_fallthru
      _
    // Predicated region
    $region10: #{tpu_custom_call.1} parent=1 // pred_check
      _
    $region11: #{tpu_custom_call.1} parent=1 // pred_check_branch
      %19 = sbr.rel (0) target = $region13
    $region12: #{tpu_custom_call.1} parent=1 // pred_region
      _
    $region13: #{tpu_custom_call.1} parent=1 // pred_fallthru
      _
    // Predicated region
    $region14: #{tpu_custom_call.1} parent=1 // pred_check
      _
    $region15: #{tpu_custom_call.1} parent=1 // pred_check_branch
      %21 = sbr.rel (0) target = $region17
    $region16: #{tpu_custom_call.1} parent=1 // pred_region
      _
    $region17: #{tpu_custom_call.1} parent=1 // pred_fallthru
      _
    // Predicated region
    $region18: #{tpu_custom_call.1} parent=1 // pred_check
      _
    $region19: #{tpu_custom_call.1} parent=1 // pred_check_branch
      %23 = sbr.rel (0) target = $region21
    $region20: #{tpu_custom_call.1} parent=1 // pred_region
      _
    $region21: #{tpu_custom_call.1} parent=1 // pred_fallthru
      _
    // Predicated region
    $region22: #{tpu_custom_call.1} parent=1 // pred_check
      _
    $region23: #{tpu_custom_call.1} parent=1 // pred_check_branch
      %25 = sbr.rel (0) target = $region25
    $region24: #{tpu_custom_call.1} parent=1 // pred_region
      _
    $region25: #{tpu_custom_call.1} parent=1 // pred_fallthru
      _
    // Predicated region
    $region26: #{tpu_custom_call.1} parent=1 // pred_check
      _
    $region27: #{tpu_custom_call.1} parent=1 // pred_check_branch
      %27 = sbr.rel (0) target = $region29
    $region28: #{tpu_custom_call.1} parent=1 // pred_region
      _
    $region29: #{tpu_custom_call.1} parent=1 // pred_fallthru
      _
    // Predicated region
    $region30: #{tpu_custom_call.1} parent=1 // pred_check
      _
    $region31: #{tpu_custom_call.1} parent=1 // pred_check_branch
      %29 = sbr.rel (0) target = $region33
    $region32: #{tpu_custom_call.1} parent=1 // pred_region
      _
    $region33: #{tpu_custom_call.1} parent=1 // pred_fallthru
      _
    %v30 = vld [vmem:[%s0] sm:$0xff]
    %v31 = vld [vmem:[%s2] sm:$0xff]
    %v32 = vld [vmem:[%s2 + $0x8] sm:$0xff]
    %v33 = vld [vmem:[%s2 + $0x10] sm:$0xff]
    %v34 = vld [vmem:[%s2 + $0x18] sm:$0xff]
    %v35 = vld [vmem:[%s3] sm:$0x1]
    %v37 = vlaneseq
    %v38 = vshrl.u32 %v37, 7
    %v39 = vsub.s32 0, %v38
    %v40 = vrot.slane %v35, %v39
    %vm42 = vcmask 261120
    %v44 = vsel %vm42, %v30, 0
    %46 = vmatprep.subr.mxu0 0.0
    %47 = vmatpush1.msra.mxu0 %v31
    %48 = vmatprep.subr.mxu0 0.0
    %49 = vmatpush1.msra.mxu0 %v32
    %50 = vmatprep.subr.mxu0 0.0
    %51 = vmatpush1.msra.mxu0 %v33
    %52 = vmatprep.subr.mxu0 0.0
    %53 = vmatpush1.msra.mxu0 %v34
    %54 = vmatprep.subr.mxu0 0.0
    %55 = vmatpush1.msra.mxu0 0.0
    %56 = vmatprep.subr.mxu0 0.0
    %57 = vmatpush1.msra.mxu0 0.0
    %58 = vmatprep.subr.mxu0 0.0
    %59 = vmatpush1.msra.mxu0 0.0
    %60 = vmatprep.subr.mxu0 0.0
    %61 = vmatpush1.msra.mxu0 0.0
    %62 = vmatprep.subr.mxu0 0.0
    %63 = vmatpush1.msra.mxu0 0.0
    %64 = vmatprep.subr.mxu0 0.0
    %65 = vmatpush1.msra.mxu0 0.0
    %66 = vmatprep.subr.mxu0 0.0
    %67 = vmatpush1.msra.mxu0 0.0
    %68 = vmatprep.subr.mxu0 0.0
    %69 = vmatpush1.msra.mxu0 0.0
    %70 = vmatprep.subr.mxu0 0.0
    %71 = vmatpush1.msra.mxu0 0.0
    %72 = vmatprep.subr.mxu0 0.0
    %73 = vmatpush1.msra.mxu0 0.0
    %74 = vmatprep.subr.mxu0 0.0
    %75 = vmatpush1.msra.mxu0 0.0
    %76 = vmatprep.subr.mxu0 0.0
    %77 = vmatpush1.msra.mxu0 0.0
    %78 = vmatprep.subr.mxu0 0.0
    %79 = vmatpush1.msra.mxu0 0.0
    %80 = vmatprep.subr.mxu0 0.0
    %81 = vmatpush1.msra.mxu0 0.0
    %82 = vmatprep.subr.mxu0 0.0
    %83 = vmatpush1.msra.mxu0 0.0
    %84 = vmatprep.subr.mxu0 0.0
    %85 = vmatpush1.msra.mxu0 0.0
    %86 = vmatprep.subr.mxu0 0.0
    %87 = vmatpush1.msra.mxu0 0.0
    %88 = vmatprep.subr.mxu0 0.0
    %89 = vmatpush1.msra.mxu0 0.0
    %90 = vmatprep.subr.mxu0 0.0
    %91 = vmatpush1.msra.mxu0 0.0
    %92 = vmatprep.subr.mxu0 0.0
    %93 = vmatpush1.msra.mxu0 0.0
    %94 = vmatprep.subr.mxu0 0.0
    %95 = vmatpush1.msra.mxu0 0.0
    %96 = vmatprep.subr.mxu0 0.0
    %97 = vmatpush1.msra.mxu0 0.0
    %98 = vmatprep.subr.mxu0 0.0
    %99 = vmatpush1.msra.mxu0 0.0
    %100 = vmatprep.subr.mxu0 0.0
    %101 = vmatpush1.msra.mxu0 0.0
    %102 = vmatprep.subr.mxu0 0.0
    %103 = vmatpush1.msra.mxu0 0.0
    %104 = vmatprep.subr.mxu0 0.0
    %105 = vmatpush1.msra.mxu0 0.0
    %106 = vmatprep.subr.mxu0 0.0
    %107 = vmatpush1.msra.mxu0 0.0
    %108 = vmatprep.subr.mxu0 0.0
    %109 = vmatpush1.msra.mxu0 0.0
    %110 = vmatprep.mubr.f32.mxu0 0.0
    %111 = vmatmul.mubr.f32.gmra.mrb[0].mxu0 %v44
    %v112 = vpop.f32.mrb[0].mxu0
    %v113 = vadd.f32 %v40, %v112
    %v114 = vpop.f32.mrb[0].mxu0
    %115 = vdwg.mxu0
    %v116 = vmax.f32 %v113, 0.0
    %v117 = vld [vmem:[%s4] sm:$0x1f]
    %v118 = vld [vmem:[%s5] sm:$0x1]
    %v120 = vlaneseq
    %v121 = vshrl.u32 %v120, 7
    %v122 = vsub.s32 0, %v121
    %v123 = vrot.slane %v118, %v122
    %vm125 = vcmask 39936
    %v127 = vsel %vm125, %v116, 0
    %vm129 = vcmask 1044480
    %v131 = vsel %vm129, %v117, 0
    %133 = vmatprep.subr.mxu0 0.0
    %134 = vmatpush1.msra.mxu0 %v131
    %135 = vmatprep.subr.mxu0 0.0
    %136 = vmatpush1.msra.mxu0 0.0
    %137 = vmatprep.subr.mxu0 0.0
    %138 = vmatpush1.msra.mxu0 0.0
    %139 = vmatprep.subr.mxu0 0.0
    %140 = vmatpush1.msra.mxu0 0.0
    %141 = vmatprep.subr.mxu0 0.0
    %142 = vmatpush1.msra.mxu0 0.0
    %143 = vmatprep.subr.mxu0 0.0
    %144 = vmatpush1.msra.mxu0 0.0
    %145 = vmatprep.subr.mxu0 0.0
    %146 = vmatpush1.msra.mxu0 0.0
    %147 = vmatprep.subr.mxu0 0.0
    %148 = vmatpush1.msra.mxu0 0.0
    %149 = vmatprep.subr.mxu0 0.0
    %150 = vmatpush1.msra.mxu0 0.0
    %151 = vmatprep.subr.mxu0 0.0
    %152 = vmatpush1.msra.mxu0 0.0
    %153 = vmatprep.subr.mxu0 0.0
    %154 = vmatpush1.msra.mxu0 0.0
    %155 = vmatprep.subr.mxu0 0.0
    %156 = vmatpush1.msra.mxu0 0.0
    %157 = vmatprep.subr.mxu0 0.0
    %158 = vmatpush1.msra.mxu0 0.0
    %159 = vmatprep.subr.mxu0 0.0
    %160 = vmatpush1.msra.mxu0 0.0
    %161 = vmatprep.subr.mxu0 0.0
    %162 = vmatpush1.msra.mxu0 0.0
    %163 = vmatprep.subr.mxu0 0.0
    %164 = vmatpush1.msra.mxu0 0.0
    %165 = vmatprep.subr.mxu0 0.0
    %166 = vmatpush1.msra.mxu0 0.0
    %167 = vmatprep.subr.mxu0 0.0
    %168 = vmatpush1.msra.mxu0 0.0
    %169 = vmatprep.subr.mxu0 0.0
    %170 = vmatpush1.msra.mxu0 0.0
    %171 = vmatprep.subr.mxu0 0.0
    %172 = vmatpush1.msra.mxu0 0.0
    %173 = vmatprep.subr.mxu0 0.0
    %174 = vmatpush1.msra.mxu0 0.0
    %175 = vmatprep.subr.mxu0 0.0
    %176 = vmatpush1.msra.mxu0 0.0
    %177 = vmatprep.subr.mxu0 0.0
    %178 = vmatpush1.msra.mxu0 0.0
    %179 = vmatprep.subr.mxu0 0.0
    %180 = vmatpush1.msra.mxu0 0.0
    %181 = vmatprep.subr.mxu0 0.0
    %182 = vmatpush1.msra.mxu0 0.0
    %183 = vmatprep.subr.mxu0 0.0
    %184 = vmatpush1.msra.mxu0 0.0
    %185 = vmatprep.subr.mxu0 0.0
    %186 = vmatpush1.msra.mxu0 0.0
    %187 = vmatprep.subr.mxu0 0.0
    %188 = vmatpush1.msra.mxu0 0.0
    %189 = vmatprep.subr.mxu0 0.0
    %190 = vmatpush1.msra.mxu0 0.0
    %191 = vmatprep.subr.mxu0 0.0
    %192 = vmatpush1.msra.mxu0 0.0
    %193 = vmatprep.subr.mxu0 0.0
    %194 = vmatpush1.msra.mxu0 0.0
    %195 = vmatprep.subr.mxu0 0.0
    %196 = vmatpush1.msra.mxu0 0.0
    %197 = vmatprep.mubr.f32.mxu0 0.0
    %198 = vmatmul.mubr.f32.gmra.mrb[0].mxu0 %v127
    %v199 = vpop.f32.mrb[0].mxu0
    %v200 = vadd.f32 %v123, %v199
    %v201 = vpop.f32.mrb[0].mxu0
    %202 = vdwg.mxu0
    %v203 = vmax.f32 %v200, 0.0
    %v204 = vld [vmem:[%s6] sm:$0xff]
    %v205 = vld [vmem:[%s6 + $0x8] sm:$0xff]
    %v206 = vld [vmem:[%s6 + $0x10] sm:$0xf]
    %v207 = vld [vmem:[%s7] sm:$0x1]
    %v209 = vlaneseq
    %v210 = vshrl.u32 %v209, 7
    %v211 = vsub.s32 0, %v210
    %v212 = vrot.slane %v207, %v211
    %vm214 = vcmask 162816
    %v216 = vsel %vm214, %v203, 0
    %vm218 = vcmask 1043456
    %v220 = vsel %vm218, %v206, 0
    %222 = vmatprep.subr.mxu0 0.0
    %223 = vmatpush1.msra.mxu0 %v204
    %224 = vmatprep.subr.mxu0 0.0
    %225 = vmatpush1.msra.mxu0 %v205
    %226 = vmatprep.subr.mxu0 0.0
    %227 = vmatpush1.msra.mxu0 %v220
    %228 = vmatprep.subr.mxu0 0.0
    %229 = vmatpush1.msra.mxu0 0.0
    %230 = vmatprep.subr.mxu0 0.0
    %231 = vmatpush1.msra.mxu0 0.0
    %232 = vmatprep.subr.mxu0 0.0
    %233 = vmatpush1.msra.mxu0 0.0
    %234 = vmatprep.subr.mxu0 0.0
    %235 = vmatpush1.msra.mxu0 0.0
    %236 = vmatprep.subr.mxu0 0.0
    %237 = vmatpush1.msra.mxu0 0.0
    %238 = vmatprep.subr.mxu0 0.0
    %239 = vmatpush1.msra.mxu0 0.0
    %240 = vmatprep.subr.mxu0 0.0
    %241 = vmatpush1.msra.mxu0 0.0
    %242 = vmatprep.subr.mxu0 0.0
    %243 = vmatpush1.msra.mxu0 0.0
    %244 = vmatprep.subr.mxu0 0.0
    %245 = vmatpush1.msra.mxu0 0.0
    %246 = vmatprep.subr.mxu0 0.0
    %247 = vmatpush1.msra.mxu0 0.0
    %248 = vmatprep.subr.mxu0 0.0
    %249 = vmatpush1.msra.mxu0 0.0
    %250 = vmatprep.subr.mxu0 0.0
    %251 = vmatpush1.msra.mxu0 0.0
    %252 = vmatprep.subr.mxu0 0.0
    %253 = vmatpush1.msra.mxu0 0.0
    %254 = vmatprep.subr.mxu0 0.0
    %255 = vmatpush1.msra.mxu0 0.0
    %256 = vmatprep.subr.mxu0 0.0
    %257 = vmatpush1.msra.mxu0 0.0
    %258 = vmatprep.subr.mxu0 0.0
    %259 = vmatpush1.msra.mxu0 0.0
    %260 = vmatprep.subr.mxu0 0.0
    %261 = vmatpush1.msra.mxu0 0.0
    %262 = vmatprep.subr.mxu0 0.0
    %263 = vmatpush1.msra.mxu0 0.0
    %264 = vmatprep.subr.mxu0 0.0
    %265 = vmatpush1.msra.mxu0 0.0
    %266 = vmatprep.subr.mxu0 0.0
    %267 = vmatpush1.msra.mxu0 0.0
    %268 = vmatprep.subr.mxu0 0.0
    %269 = vmatpush1.msra.mxu0 0.0
    %270 = vmatprep.subr.mxu0 0.0
    %271 = vmatpush1.msra.mxu0 0.0
    %272 = vmatprep.subr.mxu0 0.0
    %273 = vmatpush1.msra.mxu0 0.0
    %274 = vmatprep.subr.mxu0 0.0
    %275 = vmatpush1.msra.mxu0 0.0
    %276 = vmatprep.subr.mxu0 0.0
    %277 = vmatpush1.msra.mxu0 0.0
    %278 = vmatprep.subr.mxu0 0.0
    %279 = vmatpush1.msra.mxu0 0.0
    %280 = vmatprep.subr.mxu0 0.0
    %281 = vmatpush1.msra.mxu0 0.0
    %282 = vmatprep.subr.mxu0 0.0
    %283 = vmatpush1.msra.mxu0 0.0
    %284 = vmatprep.subr.mxu0 0.0
    %285 = vmatpush1.msra.mxu0 0.0
    %286 = vmatprep.mubr.f32.mxu0 0.0
    %287 = vmatmul.mubr.f32.gmra.mrb[0].mxu0 %v216
    %v288 = vpop.f32.mrb[0].mxu0
    %v289 = vadd.f32 %v212, %v288
    %v290 = vpop.f32.mrb[0].mxu0
    %291 = vdwg.mxu0
    %v292 = vld [vmem:[%s1] sm:$0xff]
    %v293 = vmul.f32 %v289, %v292
    %vm294 = vcmask 130048
    %v295 = vsel %vm294, %v293, -inf
    %296 = vmax.xlane.f32.xlu0 %v295
    %v297 = vpop.xlane.xlu0 %296
    %v298 = vsub.f32 %v293, %v297
    %v299 = vmul.f32 %v298, 1.442695
    %v300 = vpow.pop %v299
    %v301 = vsel %vm294, %v300, 0.0
    %302 = vadd.xlane.f32.xlu0 %v301
    %v303 = vpop.xlane.xlu0 %302
    %v304 = vrcp.pop %v303
    %v305 = vmul.f32 1.0, %v304
    %v306 = vmul.f32 %v300, %v305
    %307 = vst.msk [vmem:[#allocation2] sm:$0xff] %vm294, %v306
    // Predicated region
    $region34: #{tpu_custom_call.1} parent=1 // pred_check
      _
    $region35: #{tpu_custom_call.1} parent=1 // pred_check_branch
      %309 = sbr.rel (0) target = $region37
    $region36: #{tpu_custom_call.1} parent=1 // pred_region
      %s311 = ssub.s32 128, 128
      %312 = vsyncadd [#allocation3], %s311
      %s314 = sshll.u32 [#allocation2], 4
      %s315 = int_to_ptr.vmem [resolvable:$true] %s314
      %317 = dma.vmem_to_hbm [thread:$0]  %s315, 128, %s8, [#allocation3]
    $region37: #{tpu_custom_call.1} parent=1 // pred_fallthru
      _
    // Predicated region
    $region38: #{tpu_custom_call.1} parent=1 // pred_check
      _
    $region39: #{tpu_custom_call.1} parent=1 // pred_check_branch
      %319 = sbr.rel (0) target = $region41
    $region40: #{tpu_custom_call.1} parent=1 // pred_region
      %320 = dma.done [#allocation3], 128
    $region41: #{tpu_custom_call.1} parent=1 // pred_fallthru
      _
    %321 = vsyncpa [#allocation3], 1

</llo_original>
